<compile_context>
chip_gen: v6e
topology: v6e:2x2x1
jax: 0.10.0
libtpu: 0.0.40
codegen_flags: <defaults>
</compile_context>

<pallas_src>
import jax
import jax.numpy as jnp
from jax.experimental import pallas as pl
from jax.experimental.pallas import tpu as pltpu


def _round_up(n: int, m: int) -> int:
    return ((n + m - 1) // m) * m


def _cdiv(a: int, b: int) -> int:
    return -(-a // b)


def _choose_tiling(batch: int, tb_max: int):
    """Pick (tile, padded_batch, num_tiles) with minimal padding and balanced tiles."""
    b128 = _round_up(max(batch, 1), 128)          # pad only to the 128-lane tile
    num_tiles = _cdiv(b128, tb_max)
    # v7x megacore: make sure a 'parallel' grid has >= 2 balanced steps whenever
    # there is enough work to amortize the extra per-step overhead.
    if num_tiles == 1 and b128 >= 2048:
        num_tiles = 2
    tb = _round_up(_cdiv(b128, num_tiles), 128)
    return tb, tb * num_tiles, num_tiles


def mbnet_kernel(x_ref, w1_ref, b1_ref, w2_ref, b2_ref, w3_ref, b3_ref, o_ref):
    # One batch tile, fully fused forward pass.  All operands live in VMEM.
    x = x_ref[...]                                                       # (8, TB) rows 4..7 zero
    h1 = jnp.dot(w1_ref[...], x, preferred_element_type=jnp.float32) + b1_ref[...]
    h1 = jnp.maximum(h1, 0.0)                                            # (16, TB)
    h2 = jnp.dot(w2_ref[...], h1, preferred_element_type=jnp.float32) + b2_ref[...]
    h2 = jnp.maximum(h2, 0.0)                                            # (16, TB)
    out = jnp.dot(w3_ref[...], h2, preferred_element_type=jnp.float32) + b3_ref[...]
    o_ref[...] = out.astype(o_ref.dtype)                                 # (8, TB) rows 2..7 zero


def prep_params(params):
    """PyTorch-layout params -> kernel params (sublane-dense, feature-major)."""
    w1, b1, w2, b2, w3, b3 = params
    w1p = jnp.pad(w1, ((0, 0), (0, 4)))          # (16, 8)  in-features 4 -> 8 (zero cols)
    w3p = jnp.pad(w3, ((0, 6), (0, 0)))          # (8, 16)  out-features 2 -> 8 (zero rows)
    b3p = jnp.pad(b3, (0, 6))                    # (8,)
    return (w1p,
            b1.reshape(16, 1),
            w2,
            b2.reshape(16, 1),
            w3p,
            b3p.reshape(8, 1))


def mbnet_forward_xT(x8T, kparams, tb_max=32768):
    """Feature-major fast path (no HBM relayout).

    x8T: (8, B) f32, rows 0..3 = input features, rows 4..7 ignored (W1 padding
    columns are zero).  Returns (8, B) f32 with rows 0..1 = outputs, rows 2..7
    exactly zero.  Keep this layout end-to-end to avoid wrapper transposes.
    """
    w1p, b1, w2, b2, w3p, b3 = kparams
    f, batch = x8T.shape
    assert f == 8, f
    tb, b_pad, num_tiles = _choose_tiling(batch, tb_max)
    if b_pad != batch:
        x8T = jnp.pad(x8T, ((0, 0), (0, b_pad - batch)))

    def resident(a):  # tiny weights/biases: constant index map -> stay in VMEM
        return pl.BlockSpec(a.shape, lambda i: (0, 0))

    out8T = pl.pallas_call(
        mbnet_kernel,
        out_shape=jax.ShapeDtypeStruct((8, b_pad), jnp.float32),
        grid_spec=pltpu.PrefetchScalarGridSpec(
            num_scalar_prefetch=0,
            grid=(num_tiles,),
            in_specs=[
                pl.BlockSpec((8, tb), lambda i: (0, i)),   # x^T tiled over batch lanes
                resident(w1p), resident(b1),
                resident(w2), resident(b2),
                resident(w3p), resident(b3),
            ],
            out_specs=pl.BlockSpec((8, tb), lambda i: (0, i)),
        ),
        compiler_params=pltpu.CompilerParams(
            dimension_semantics=("parallel",),     # independent batch tiles -> megacore
            vmem_limit_bytes=48 * 1024 * 1024,     # headroom for tb up to 32768
        ),
    )(x8T, w1p, b1, w2, b2, w3p, b3)

    return out8T[:, :batch]


def mbnet_forward(x, params, tb_max=32768):
    """PyTorch-compatible interface: x (B, 4) f32 -> (B, 2) f32.

    NOTE: the pad/transpose here and the final slice/transpose are standalone
    HBM round trips; in production keep activations feature-major (8, B) and
    call mbnet_forward_xT directly (review item 3).
    """
    kparams = prep_params(params)
    batch = x.shape[0]
    x8T = jnp.pad(x, ((0, 0), (0, 4))).T            # (8, B), rows 4..7 zero
    out8T = mbnet_forward_xT(x8T, kparams, tb_max)  # (8, B)
    return out8T[:2, :].T                           # (B, 2)


def init_params(key):
    """Deterministic init mimicking torch.nn.Linear (uniform +-1/sqrt(fan_in)).
    Weights stored (out_features, in_features) like PyTorch; biases (out_features,)."""
    def linear(k, fan_in, fan_out):
        kw, kb = jax.random.split(k)
        bound = 1.0 / jnp.sqrt(fan_in)
        w = jax.random.uniform(kw, (fan_out, fan_in), jnp.float32, -bound, bound)
        b = jax.random.uniform(kb, (fan_out,), jnp.float32, -bound, bound)
        return w, b

    k1, k2, k3 = jax.random.split(key, 3)
    w1, b1 = linear(k1, 4, 16)
    w2, b2 = linear(k2, 16, 16)
    w3, b3 = linear(k3, 16, 2)
    return (w1, b1, w2, b2, w3, b3)


def mbnet_ref(x, params):
    w1, b1, w2, b2, w3, b3 = params
    h1 = jnp.maximum(x @ w1.T + b1, 0.0)
    h2 = jnp.maximum(h1 @ w2.T + b2, 0.0)
    return h2 @ w3.T + b3


if __name__ == "__main__":
    key = jax.random.PRNGKey(0)
    kp_key, kx1, kx2, kx3 = jax.random.split(key, 4)
    params = init_params(kp_key)

    # Small batch (single 128-lane tile), the module's typical usage.
    x = jax.random.normal(kx1, (8, 4), jnp.float32)
    out = jax.block_until_ready(mbnet_forward(x, params))
    ref = mbnet_ref(x, params)
    assert out.shape == (8, 2), out.shape
    assert jnp.allclose(out, ref, atol=1e-5, rtol=1e-5), "mismatch vs reference (B=8)"

    # Ragged batch with a forced multi-step pipelined grid (tb_max=128 -> 3 steps).
    x2 = jax.random.normal(kx2, (300, 4), jnp.float32)
    out2 = jax.block_until_ready(mbnet_forward(x2, params, tb_max=128))
    assert out2.shape == (300, 2), out2.shape
    assert jnp.allclose(out2, mbnet_ref(x2, params), atol=1e-5, rtol=1e-5), \
        "mismatch vs reference (B=300)"

    # Batch large enough to trigger the >=2-tile megacore split with default tiles.
    x3 = jax.random.normal(kx3, (2500, 4), jnp.float32)
    out3 = jax.block_until_ready(mbnet_forward(x3, params))
    assert out3.shape == (2500, 2), out3.shape
    assert jnp.allclose(out3, mbnet_ref(x3, params), atol=1e-5, rtol=1e-5), \
        "mismatch vs reference (B=2500)"

    # Feature-major fast path used directly (no wrapper relayout).
    kparams = prep_params(params)
    x8T = jnp.pad(x, ((0, 0), (0, 4))).T            # upstream would produce this layout
    outT = jax.block_until_ready(mbnet_forward_xT(x8T, kparams))
    assert outT.shape == (8, 8), outT.shape
    assert jnp.allclose(outT[:2, :].T, ref, atol=1e-5, rtol=1e-5), \
        "mismatch vs reference (feature-major path)"
    assert jnp.all(outT[2:, :] == 0.0), "padded output rows must be exactly zero"

    print("KERNEL_OK")
</pallas_src>

<mosaic_0001>
module attributes {stable_mosaic.version = 11 : i64} {
  func.func @mbnet_kernel(%arg0: i32, %arg1: memref<8x128xf32, #tpu.memory_space<vmem>>, %arg2: memref<16x8xf32, #tpu.memory_space<vmem>>, %arg3: memref<16x1xf32, #tpu.memory_space<vmem>>, %arg4: memref<16x16xf32, #tpu.memory_space<vmem>>, %arg5: memref<16x1xf32, #tpu.memory_space<vmem>>, %arg6: memref<8x16xf32, #tpu.memory_space<vmem>>, %arg7: memref<8x1xf32, #tpu.memory_space<vmem>>, %arg8: memref<8x128xf32, #tpu.memory_space<vmem>>) attributes {dimension_semantics = [#tpu.dimension_semantics<parallel>], iteration_bounds = array<i64: 1>, scalar_prefetch = 0 : i64, scratch_operands = 0 : i64, tpu.core_type = #tpu.core_type<tc>, window_params = [{transform_indices = @transform_0, window_bounds = array<i64: 8, 128>}, {pipeline_mode = #tpu.pipeline_mode<synchronous>, transform_indices = @transform_1, window_bounds = array<i64: 16, 8>}, {pipeline_mode = #tpu.pipeline_mode<synchronous>, transform_indices = @transform_2, window_bounds = array<i64: 16, 1>}, {pipeline_mode = #tpu.pipeline_mode<synchronous>, transform_indices = @transform_3, window_bounds = array<i64: 16, 16>}, {pipeline_mode = #tpu.pipeline_mode<synchronous>, transform_indices = @transform_4, window_bounds = array<i64: 16, 1>}, {pipeline_mode = #tpu.pipeline_mode<synchronous>, transform_indices = @transform_5, window_bounds = array<i64: 8, 16>}, {pipeline_mode = #tpu.pipeline_mode<synchronous>, transform_indices = @transform_6, window_bounds = array<i64: 8, 1>}, {transform_indices = @transform_7, window_bounds = array<i64: 8, 128>}]} {
    %c0 = arith.constant 0 : index
    %c0_0 = arith.constant 0 : index
    %0 = vector.load %arg1[%c0, %c0_0] : memref<8x128xf32, #tpu.memory_space<vmem>>, vector<8x128xf32>
    %c0_1 = arith.constant 0 : index
    %c0_2 = arith.constant 0 : index
    %1 = vector.load %arg2[%c0_1, %c0_2] : memref<16x8xf32, #tpu.memory_space<vmem>>, vector<16x8xf32>
    %cst = arith.constant dense<0.000000e+00> : vector<16x128xf32>
    %2 = tpu.matmul %1, %0, %cst {dimension_numbers = #tpu.dot_dimension_numbers<[1], [0], [0], [1], [0, 0, 1, 1], [], []>} : vector<16x8xf32>, vector<8x128xf32>, vector<16x128xf32> -> vector<16x128xf32>
    %c0_3 = arith.constant 0 : index
    %c0_4 = arith.constant 0 : index
    %3 = vector.load %arg3[%c0_3, %c0_4] : memref<16x1xf32, #tpu.memory_space<vmem>>, vector<16x1xf32>
    %4 = vector.broadcast %3 : vector<16x1xf32> to vector<16x128xf32>
    %5 = arith.addf %2, %4 : vector<16x128xf32>
    %cst_5 = arith.constant 0.000000e+00 : f32
    %6 = vector.broadcast %cst_5 : f32 to vector<16x128xf32>
    %7 = arith.maximumf %5, %6 : vector<16x128xf32>
    %c0_6 = arith.constant 0 : index
    %c0_7 = arith.constant 0 : index
    %8 = vector.load %arg4[%c0_6, %c0_7] : memref<16x16xf32, #tpu.memory_space<vmem>>, vector<16x16xf32>
    %cst_8 = arith.constant dense<0.000000e+00> : vector<16x128xf32>
    %9 = tpu.matmul %8, %7, %cst_8 {dimension_numbers = #tpu.dot_dimension_numbers<[1], [0], [0], [1], [0, 0, 1, 1], [], []>} : vector<16x16xf32>, vector<16x128xf32>, vector<16x128xf32> -> vector<16x128xf32>
    %c0_9 = arith.constant 0 : index
    %c0_10 = arith.constant 0 : index
    %10 = vector.load %arg5[%c0_9, %c0_10] : memref<16x1xf32, #tpu.memory_space<vmem>>, vector<16x1xf32>
    %11 = vector.broadcast %10 : vector<16x1xf32> to vector<16x128xf32>
    %12 = arith.addf %9, %11 : vector<16x128xf32>
    %cst_11 = arith.constant 0.000000e+00 : f32
    %13 = vector.broadcast %cst_11 : f32 to vector<16x128xf32>
    %14 = arith.maximumf %12, %13 : vector<16x128xf32>
    %c0_12 = arith.constant 0 : index
    %c0_13 = arith.constant 0 : index
    %15 = vector.load %arg6[%c0_12, %c0_13] : memref<8x16xf32, #tpu.memory_space<vmem>>, vector<8x16xf32>
    %cst_14 = arith.constant dense<0.000000e+00> : vector<8x128xf32>
    %16 = tpu.matmul %15, %14, %cst_14 {dimension_numbers = #tpu.dot_dimension_numbers<[1], [0], [0], [1], [0, 0, 1, 1], [], []>} : vector<8x16xf32>, vector<16x128xf32>, vector<8x128xf32> -> vector<8x128xf32>
    %c0_15 = arith.constant 0 : index
    %c0_16 = arith.constant 0 : index
    %17 = vector.load %arg7[%c0_15, %c0_16] : memref<8x1xf32, #tpu.memory_space<vmem>>, vector<8x1xf32>
    %18 = vector.broadcast %17 : vector<8x1xf32> to vector<8x128xf32>
    %19 = arith.addf %16, %18 : vector<8x128xf32>
    %c0_17 = arith.constant 0 : index
    %c0_18 = arith.constant 0 : index
    %20 = vector.load %arg8[%c0_17, %c0_18] : memref<8x128xf32, #tpu.memory_space<vmem>>, vector<8x128xf32>
    tpu.vector_store %arg8[%c0_17, %c0_18], %19 {strides = array<i32>} : memref<8x128xf32, #tpu.memory_space<vmem>>, vector<8x128xf32>,
    return
  }
  func.func @transform_0(%arg0: i32) -> (i32, i32) {
    %c0_i32 = arith.constant 0 : i32
    %c0_i32_0 = arith.constant 0 : i32
    return %c0_i32, %arg0 : i32, i32
  }
  func.func @transform_1(%arg0: i32) -> (i32, i32) {
    %c0_i32 = arith.constant 0 : i32
    %c0_i32_0 = arith.constant 0 : i32
    %c0_i32_1 = arith.constant 0 : i32
    return %c0_i32, %c0_i32_0 : i32, i32
  }
  func.func @transform_2(%arg0: i32) -> (i32, i32) {
    %c0_i32 = arith.constant 0 : i32
    %c0_i32_0 = arith.constant 0 : i32
    %c0_i32_1 = arith.constant 0 : i32
    return %c0_i32, %c0_i32_0 : i32, i32
  }
  func.func @transform_3(%arg0: i32) -> (i32, i32) {
    %c0_i32 = arith.constant 0 : i32
    %c0_i32_0 = arith.constant 0 : i32
    %c0_i32_1 = arith.constant 0 : i32
    return %c0_i32, %c0_i32_0 : i32, i32
  }
  func.func @transform_4(%arg0: i32) -> (i32, i32) {
    %c0_i32 = arith.constant 0 : i32
    %c0_i32_0 = arith.constant 0 : i32
    %c0_i32_1 = arith.constant 0 : i32
    return %c0_i32, %c0_i32_0 : i32, i32
  }
  func.func @transform_5(%arg0: i32) -> (i32, i32) {
    %c0_i32 = arith.constant 0 : i32
    %c0_i32_0 = arith.constant 0 : i32
    %c0_i32_1 = arith.constant 0 : i32
    return %c0_i32, %c0_i32_0 : i32, i32
  }
  func.func @transform_6(%arg0: i32) -> (i32, i32) {
    %c0_i32 = arith.constant 0 : i32
    %c0_i32_0 = arith.constant 0 : i32
    %c0_i32_1 = arith.constant 0 : i32
    return %c0_i32, %c0_i32_0 : i32, i32
  }
  func.func @transform_7(%arg0: i32) -> (i32, i32) {
    %c0_i32 = arith.constant 0 : i32
    %c0_i32_0 = arith.constant 0 : i32
    return %c0_i32, %arg0 : i32, i32
  }
}

</mosaic_0001>

<llo_original>
// kernel: tpu_custom_call.1
$region0: #{tpu_custom_call.1}
  #allocation0 [shape = 'u32[]', space=smem, size = 0x4, offset = 0x4, fixed_abs, tag = 'smem constant byte address 0x4 - core index']
  #allocation1 [shape = 'u32[144,128]{1,0:T(1,128)}', space=vmem, size = 0x12000, scoped, tag = 'internal scratch']
  %s0 = inlined_call_operand.vmem [shape: f32[8,128], index: 0, kind: input, shape index: {}]
  %s1 = inlined_call_operand.vmem [shape: f32[16,8], index: 1, kind: input, shape index: {}]
  %s2 = inlined_call_operand.vmem [shape: f32[16,1], index: 2, kind: input, shape index: {}]
  %s3 = inlined_call_operand.vmem [shape: f32[16,16], index: 3, kind: input, shape index: {}]
  %s4 = inlined_call_operand.vmem [shape: f32[16,1], index: 4, kind: input, shape index: {}]
  %s5 = inlined_call_operand.vmem [shape: f32[8,16], index: 5, kind: input, shape index: {}]
  %s6 = inlined_call_operand.vmem [shape: f32[8,1], index: 6, kind: input, shape index: {}]
  %s7 = inlined_call_operand.hbm [shape: f32[8,128], index: 7, kind: output, shape index: {}]
  %s8 = sld [smem:[#allocation0]]
  $region38: #{tpu_custom_call.1} parent=0
    _
  %s10 = ssub.s32 1, %s8
  %s11 = scalar_select 0, %s10, %s8
  $region1: #{tpu_custom_call.1} parent=0
    #allocation2 [shape = 'u8[4096]{0}', space=vmem, size = 0x1000, scoped, tag = 'output window, operand 0, single buffered']
    #allocation3 [shape = 's32[1]{0}', space=sflag, size = 0x4, scoped, tag = 'scoped memory for tpu_custom_call.1']
    %12 = vsyncpa [#allocation3], 0
    // Predicated region
    $region2: #{tpu_custom_call.1} parent=1 // pred_check
      _
    $region3: #{tpu_custom_call.1} parent=1 // pred_check_branch
      %14 = sbr.rel (0) target = $region5
    $region4: #{tpu_custom_call.1} parent=1 // pred_region
      _
    $region5: #{tpu_custom_call.1} parent=1 // pred_fallthru
      _
    // Predicated region
    $region6: #{tpu_custom_call.1} parent=1 // pred_check
      _
    $region7: #{tpu_custom_call.1} parent=1 // pred_check_branch
      %16 = sbr.rel (0) target = $region9
    $region8: #{tpu_custom_call.1} parent=1 // pred_region
      _
    $region9: #{tpu_custom_call.1} parent=1 // pred_fallthru
      _
    // Predicated region
    $region10: #{tpu_custom_call.1} parent=1 // pred_check
      _
    $region11: #{tpu_custom_call.1} parent=1 // pred_check_branch
      %18 = sbr.rel (0) target = $region13
    $region12: #{tpu_custom_call.1} parent=1 // pred_region
      _
    $region13: #{tpu_custom_call.1} parent=1 // pred_fallthru
      _
    // Predicated region
    $region14: #{tpu_custom_call.1} parent=1 // pred_check
      _
    $region15: #{tpu_custom_call.1} parent=1 // pred_check_branch
      %20 = sbr.rel (0) target = $region17
    $region16: #{tpu_custom_call.1} parent=1 // pred_region
      _
    $region17: #{tpu_custom_call.1} parent=1 // pred_fallthru
      _
    // Predicated region
    $region18: #{tpu_custom_call.1} parent=1 // pred_check
      _
    $region19: #{tpu_custom_call.1} parent=1 // pred_check_branch
      %22 = sbr.rel (0) target = $region21
    $region20: #{tpu_custom_call.1} parent=1 // pred_region
      _
    $region21: #{tpu_custom_call.1} parent=1 // pred_fallthru
      _
    // Predicated region
    $region22: #{tpu_custom_call.1} parent=1 // pred_check
      _
    $region23: #{tpu_custom_call.1} parent=1 // pred_check_branch
      %24 = sbr.rel (0) target = $region25
    $region24: #{tpu_custom_call.1} parent=1 // pred_region
      _
    $region25: #{tpu_custom_call.1} parent=1 // pred_fallthru
      _
    // Predicated region
    $region26: #{tpu_custom_call.1} parent=1 // pred_check
      _
    $region27: #{tpu_custom_call.1} parent=1 // pred_check_branch
      %26 = sbr.rel (0) target = $region29
    $region28: #{tpu_custom_call.1} parent=1 // pred_region
      _
    $region29: #{tpu_custom_call.1} parent=1 // pred_fallthru
      _
    %v27 = vld [vmem:[%s0] sm:$0xff]
    %v28 = vld [vmem:[%s1] sm:$0xff]
    %v29 = vld [vmem:[%s1 + $0x8] sm:$0xff]
    %v30 = vld [vmem:[%s2] sm:$0xff]
    %v31 = vld [vmem:[%s2 + $0x8] sm:$0xff]
    %33 = vset.pattern.permute.xlu0 0
    %34 = vperm.xlu0 %33, %v30
    %v35 = vpop.permute.xlu0 %34
    %38 = vset.pattern.permute.xlu0 0
    %39 = vperm.xlu0 %38, %v31
    %v40 = vpop.permute.xlu0 %39
    %vm42 = vcmask 64512
    %v44 = vsel %vm42, %v28, 0
    %v47 = vsel %vm42, %v29, 0
    %49 = vmatprep.subr.mxu0 0.0
    %50 = vmatpush1.msra.mxu0 0.0
    %51 = vmatprep.subr.mxu0 0.0
    %52 = vmatpush1.msra.mxu0 0.0
    %53 = vmatprep.subr.mxu0 0.0
    %54 = vmatpush1.msra.mxu0 0.0
    %55 = vmatprep.subr.mxu0 0.0
    %56 = vmatpush1.msra.mxu0 0.0
    %57 = vmatprep.subr.mxu0 0.0
    %58 = vmatpush1.msra.mxu0 0.0
    %59 = vmatprep.subr.mxu0 0.0
    %60 = vmatpush1.msra.mxu0 0.0
    %61 = vmatprep.subr.mxu0 0.0
    %62 = vmatpush1.msra.mxu0 0.0
    %63 = vmatprep.subr.mxu0 0.0
    %64 = vmatpush1.msra.mxu0 0.0
    %65 = vmatprep.subr.mxu0 0.0
    %66 = vmatpush1.msra.mxu0 0.0
    %67 = vmatprep.subr.mxu0 0.0
    %68 = vmatpush1.msra.mxu0 0.0
    %69 = vmatprep.subr.mxu0 0.0
    %70 = vmatpush1.msra.mxu0 0.0
    %71 = vmatprep.subr.mxu0 0.0
    %72 = vmatpush1.msra.mxu0 0.0
    %73 = vmatprep.subr.mxu0 0.0
    %74 = vmatpush1.msra.mxu0 0.0
    %75 = vmatprep.subr.mxu0 0.0
    %76 = vmatpush1.msra.mxu0 0.0
    %77 = vmatprep.subr.mxu0 0.0
    %78 = vmatpush1.msra.mxu0 0.0
    %79 = vmatprep.subr.mxu0 0.0
    %80 = vmatpush1.msra.mxu0 %v27
    %81 = vmatprep.subr.mxu0 0.0
    %82 = vmatpush2.msra.mxu0 0.0
    %83 = vmatprep.subr.mxu0 0.0
    %84 = vmatpush2.msra.mxu0 0.0
    %85 = vmatprep.subr.mxu0 0.0
    %86 = vmatpush2.msra.mxu0 0.0
    %87 = vmatprep.subr.mxu0 0.0
    %88 = vmatpush2.msra.mxu0 0.0
    %89 = vmatprep.subr.mxu0 0.0
    %90 = vmatpush2.msra.mxu0 0.0
    %91 = vmatprep.subr.mxu0 0.0
    %92 = vmatpush2.msra.mxu0 0.0
    %93 = vmatprep.subr.mxu0 0.0
    %94 = vmatpush2.msra.mxu0 0.0
    %95 = vmatprep.subr.mxu0 0.0
    %96 = vmatpush2.msra.mxu0 0.0
    %97 = vmatprep.subr.mxu0 0.0
    %98 = vmatpush2.msra.mxu0 0.0
    %99 = vmatprep.subr.mxu0 0.0
    %100 = vmatpush2.msra.mxu0 0.0
    %101 = vmatprep.subr.mxu0 0.0
    %102 = vmatpush2.msra.mxu0 0.0
    %103 = vmatprep.subr.mxu0 0.0
    %104 = vmatpush2.msra.mxu0 0.0
    %105 = vmatprep.subr.mxu0 0.0
    %106 = vmatpush2.msra.mxu0 0.0
    %107 = vmatprep.subr.mxu0 0.0
    %108 = vmatpush2.msra.mxu0 0.0
    %109 = vmatprep.subr.mxu0 0.0
    %110 = vmatpush2.msra.mxu0 0.0
    %111 = vmatprep.subr.mxu0 0.0
    %112 = vmatpush2.msra.mxu0 0.0
    %113 = vmatprep.mubr.f32.mxu0 0.0
    %114 = vmatmul.mubr.f32.gmra.mxu0 %v44
    %v115 = vpop.f32.mrf.mxu0
    %v116 = vadd.f32 %v35, %v115
    %v117 = vpop.f32.mrf.mxu0
    %118 = vmatprep.mubr.f32.mxu0 0.0
    %119 = vmatmul.mubr.f32.gmra.mxu0 %v47
    %v120 = vpop.f32.mrf.mxu0
    %v121 = vadd.f32 %v40, %v120
    %v122 = vpop.f32.mrf.mxu0
    %123 = vdwg.mxu0
    %v124 = vmax.f32 %v116, 0.0
    %v125 = vmax.f32 %v121, 0.0
    %v126 = vld [vmem:[%s3] sm:$0xff]
    %v127 = vld [vmem:[%s3 + $0x8] sm:$0xff]
    %v128 = vld [vmem:[%s4] sm:$0xff]
    %v129 = vld [vmem:[%s4 + $0x8] sm:$0xff]
    %131 = vset.pattern.permute.xlu0 0
    %132 = vperm.xlu0 %131, %v128
    %v133 = vpop.permute.xlu0 %132
    %136 = vset.pattern.permute.xlu0 0
    %137 = vperm.xlu0 %136, %v129
    %v138 = vpop.permute.xlu0 %137
    %vm140 = vcmask 130048
    %v142 = vsel %vm140, %v126, 0
    %v145 = vsel %vm140, %v127, 0
    %147 = vmatprep.subr.mxu0 0.0
    %148 = vmatpush1.msra.mxu0 0.0
    %149 = vmatprep.subr.mxu0 0.0
    %150 = vmatpush1.msra.mxu0 0.0
    %151 = vmatprep.subr.mxu0 0.0
    %152 = vmatpush1.msra.mxu0 0.0
    %153 = vmatprep.subr.mxu0 0.0
    %154 = vmatpush1.msra.mxu0 0.0
    %155 = vmatprep.subr.mxu0 0.0
    %156 = vmatpush1.msra.mxu0 0.0
    %157 = vmatprep.subr.mxu0 0.0
    %158 = vmatpush1.msra.mxu0 0.0
    %159 = vmatprep.subr.mxu0 0.0
    %160 = vmatpush1.msra.mxu0 0.0
    %161 = vmatprep.subr.mxu0 0.0
    %162 = vmatpush1.msra.mxu0 0.0
    %163 = vmatprep.subr.mxu0 0.0
    %164 = vmatpush1.msra.mxu0 0.0
    %165 = vmatprep.subr.mxu0 0.0
    %166 = vmatpush1.msra.mxu0 0.0
    %167 = vmatprep.subr.mxu0 0.0
    %168 = vmatpush1.msra.mxu0 0.0
    %169 = vmatprep.subr.mxu0 0.0
    %170 = vmatpush1.msra.mxu0 0.0
    %171 = vmatprep.subr.mxu0 0.0
    %172 = vmatpush1.msra.mxu0 0.0
    %173 = vmatprep.subr.mxu0 0.0
    %174 = vmatpush1.msra.mxu0 0.0
    %175 = vmatprep.subr.mxu0 0.0
    %176 = vmatpush1.msra.mxu0 %v125
    %177 = vmatprep.subr.mxu0 0.0
    %178 = vmatpush1.msra.mxu0 %v124
    %179 = vmatprep.subr.mxu0 0.0
    %180 = vmatpush2.msra.mxu0 0.0
    %181 = vmatprep.subr.mxu0 0.0
    %182 = vmatpush2.msra.mxu0 0.0
    %183 = vmatprep.subr.mxu0 0.0
    %184 = vmatpush2.msra.mxu0 0.0
    %185 = vmatprep.subr.mxu0 0.0
    %186 = vmatpush2.msra.mxu0 0.0
    %187 = vmatprep.subr.mxu0 0.0
    %188 = vmatpush2.msra.mxu0 0.0
    %189 = vmatprep.subr.mxu0 0.0
    %190 = vmatpush2.msra.mxu0 0.0
    %191 = vmatprep.subr.mxu0 0.0
    %192 = vmatpush2.msra.mxu0 0.0
    %193 = vmatprep.subr.mxu0 0.0
    %194 = vmatpush2.msra.mxu0 0.0
    %195 = vmatprep.subr.mxu0 0.0
    %196 = vmatpush2.msra.mxu0 0.0
    %197 = vmatprep.subr.mxu0 0.0
    %198 = vmatpush2.msra.mxu0 0.0
    %199 = vmatprep.subr.mxu0 0.0
    %200 = vmatpush2.msra.mxu0 0.0
    %201 = vmatprep.subr.mxu0 0.0
    %202 = vmatpush2.msra.mxu0 0.0
    %203 = vmatprep.subr.mxu0 0.0
    %204 = vmatpush2.msra.mxu0 0.0
    %205 = vmatprep.subr.mxu0 0.0
    %206 = vmatpush2.msra.mxu0 0.0
    %207 = vmatprep.subr.mxu0 0.0
    %208 = vmatpush2.msra.mxu0 0.0
    %209 = vmatprep.subr.mxu0 0.0
    %210 = vmatpush2.msra.mxu0 0.0
    %211 = vmatprep.mubr.f32.mxu0 0.0
    %212 = vmatmul.mubr.f32.gmra.mxu0 %v142
    %v213 = vpop.f32.mrf.mxu0
    %v214 = vadd.f32 %v133, %v213
    %v215 = vpop.f32.mrf.mxu0
    %216 = vmatprep.mubr.f32.mxu0 0.0
    %217 = vmatmul.mubr.f32.gmra.mxu0 %v145
    %v218 = vpop.f32.mrf.mxu0
    %v219 = vadd.f32 %v138, %v218
    %v220 = vpop.f32.mrf.mxu0
    %221 = vdwg.mxu0
    %v222 = vmax.f32 %v214, 0.0
    %v223 = vmax.f32 %v219, 0.0
    %v224 = vld [vmem:[%s5] sm:$0xff]
    %v225 = vld [vmem:[%s6] sm:$0xff]
    %227 = vset.pattern.permute.xlu0 0
    %228 = vperm.xlu0 %227, %v225
    %v229 = vpop.permute.xlu0 %228
    %v232 = vsel %vm140, %v224, 0
    %234 = vmatprep.subr.mxu0 0.0
    %235 = vmatpush1.msra.mxu0 0.0
    %236 = vmatprep.subr.mxu0 0.0
    %237 = vmatpush1.msra.mxu0 0.0
    %238 = vmatprep.subr.mxu0 0.0
    %239 = vmatpush1.msra.mxu0 0.0
    %240 = vmatprep.subr.mxu0 0.0
    %241 = vmatpush1.msra.mxu0 0.0
    %242 = vmatprep.subr.mxu0 0.0
    %243 = vmatpush1.msra.mxu0 0.0
    %244 = vmatprep.subr.mxu0 0.0
    %245 = vmatpush1.msra.mxu0 0.0
    %246 = vmatprep.subr.mxu0 0.0
    %247 = vmatpush1.msra.mxu0 0.0
    %248 = vmatprep.subr.mxu0 0.0
    %249 = vmatpush1.msra.mxu0 0.0
    %250 = vmatprep.subr.mxu0 0.0
    %251 = vmatpush1.msra.mxu0 0.0
    %252 = vmatprep.subr.mxu0 0.0
    %253 = vmatpush1.msra.mxu0 0.0
    %254 = vmatprep.subr.mxu0 0.0
    %255 = vmatpush1.msra.mxu0 0.0
    %256 = vmatprep.subr.mxu0 0.0
    %257 = vmatpush1.msra.mxu0 0.0
    %258 = vmatprep.subr.mxu0 0.0
    %259 = vmatpush1.msra.mxu0 0.0
    %260 = vmatprep.subr.mxu0 0.0
    %261 = vmatpush1.msra.mxu0 0.0
    %262 = vmatprep.subr.mxu0 0.0
    %263 = vmatpush1.msra.mxu0 %v223
    %264 = vmatprep.subr.mxu0 0.0
    %265 = vmatpush1.msra.mxu0 %v222
    %266 = vmatprep.subr.mxu0 0.0
    %267 = vmatpush2.msra.mxu0 0.0
    %268 = vmatprep.subr.mxu0 0.0
    %269 = vmatpush2.msra.mxu0 0.0
    %270 = vmatprep.subr.mxu0 0.0
    %271 = vmatpush2.msra.mxu0 0.0
    %272 = vmatprep.subr.mxu0 0.0
    %273 = vmatpush2.msra.mxu0 0.0
    %274 = vmatprep.subr.mxu0 0.0
    %275 = vmatpush2.msra.mxu0 0.0
    %276 = vmatprep.subr.mxu0 0.0
    %277 = vmatpush2.msra.mxu0 0.0
    %278 = vmatprep.subr.mxu0 0.0
    %279 = vmatpush2.msra.mxu0 0.0
    %280 = vmatprep.subr.mxu0 0.0
    %281 = vmatpush2.msra.mxu0 0.0
    %282 = vmatprep.subr.mxu0 0.0
    %283 = vmatpush2.msra.mxu0 0.0
    %284 = vmatprep.subr.mxu0 0.0
    %285 = vmatpush2.msra.mxu0 0.0
    %286 = vmatprep.subr.mxu0 0.0
    %287 = vmatpush2.msra.mxu0 0.0
    %288 = vmatprep.subr.mxu0 0.0
    %289 = vmatpush2.msra.mxu0 0.0
    %290 = vmatprep.subr.mxu0 0.0
    %291 = vmatpush2.msra.mxu0 0.0
    %292 = vmatprep.subr.mxu0 0.0
    %293 = vmatpush2.msra.mxu0 0.0
    %294 = vmatprep.subr.mxu0 0.0
    %295 = vmatpush2.msra.mxu0 0.0
    %296 = vmatprep.subr.mxu0 0.0
    %297 = vmatpush2.msra.mxu0 0.0
    %298 = vmatprep.mubr.f32.mxu0 0.0
    %299 = vmatmul.mubr.f32.gmra.mxu0 %v232
    %v300 = vpop.f32.mrf.mxu0
    %v301 = vadd.f32 %v229, %v300
    %v302 = vpop.f32.mrf.mxu0
    %303 = vdwg.mxu0
    %304 = vst [vmem:[#allocation2] sm:$0xff] %v301
    // Predicated region
    $region30: #{tpu_custom_call.1} parent=1 // pred_check
      _
    $region31: #{tpu_custom_call.1} parent=1 // pred_check_branch
      %306 = sbr.rel (0) target = $region33
    $region32: #{tpu_custom_call.1} parent=1 // pred_region
      %s308 = ssub.s32 128, 128
      %309 = vsyncadd [#allocation3], %s308
      %s311 = sshll.u32 [#allocation2], 4
      %s312 = int_to_ptr.vmem [resolvable:$true] %s311
      %314 = dma.vmem_to_hbm [thread:$0]  %s312, 128, %s7, [#allocation3]
    $region33: #{tpu_custom_call.1} parent=1 // pred_fallthru
      _
    // Predicated region
    $region34: #{tpu_custom_call.1} parent=1 // pred_check
      _
    $region35: #{tpu_custom_call.1} parent=1 // pred_check_branch
      %316 = sbr.rel (0) target = $region37
    $region36: #{tpu_custom_call.1} parent=1 // pred_region
      %317 = dma.done [#allocation3], 128
    $region37: #{tpu_custom_call.1} parent=1 // pred_fallthru
      _
    %318 = vsyncpa [#allocation3], 1

</llo_original>
